<compile_context>
chip_gen: v6e
topology: v6e:2x2x1
jax: 0.10.0
libtpu: 0.0.40
codegen_flags: <defaults>
</compile_context>

<pallas_src>
import functools

import jax
import jax.numpy as jnp
from jax import lax
from jax.experimental import pallas as pl
from jax.experimental.pallas import tpu as pltpu

EPS = 1e-5  # nn.BatchNorm1d default eps


def _round_up(a, b):
    return ((a + b - 1) // b) * b


# ---------------------------------------------------------------------------
# Fused kernel: im2col tile -> single MXU matmul -> bias -> ReLU -> write tile,
# accumulate BN stats; normalize the resident output slab in place at the last tile.
# ---------------------------------------------------------------------------
def conv_relu_bn_kernel(x_ref, w_ref, p_ref, o_ref, xcol_ref, sum_ref, ssq_ref, *,
                        kernel_size, dilation, c_in_pad, seg, l_out,
                        batches_per_tile, m_valid):
    # x_ref   : (batches_per_tile, C_in_pad, L_pad)  bf16, halo already padded along L
    # w_ref   : (Cb, K*C_in_pad)                     bf16, tap-major contraction rows
    # p_ref   : (Cb, 3)                              f32  [conv_bias, bn_gamma, bn_beta]
    # o_ref   : (Cb, M)                              f32  lane-dense slab, VMEM-resident over M tiles
    # xcol_ref: (K*C_in_pad, tile_m)                 bf16 im2col scratch for ONE tile
    # sum_ref, ssq_ref: (Cb, 1) f32                  BN stat accumulators across M tiles
    m = pl.program_id(1)
    n_m_tiles = pl.num_programs(1)
    kc_pad = kernel_size * c_in_pad
    tile_m = batches_per_tile * seg
    total_m = o_ref.shape[1]

    @pl.when(m == 0)
    def _init():
        sum_ref[...] = jnp.zeros(sum_ref.shape, sum_ref.dtype)
        ssq_ref[...] = jnp.zeros(ssq_ref.shape, ssq_ref.dtype)
        # Zero only the per-segment lane-pad columns; valid columns are always overwritten
        # by the tap copies below, and later tiles never touch the pad columns.
        if seg > l_out:
            for n_local in range(batches_per_tile):
                xcol_ref[:, n_local * seg + l_out:(n_local + 1) * seg] = jnp.zeros(
                    (kc_pad, seg - l_out), xcol_ref.dtype)

    # ---- build im2col for this tile's batches (aligned, full-lane stores) ----
    # xcol[t*C_in_pad + c, n_local*seg + l] = x_pad[n_local, c, l + t*dilation]
    def _build_one_batch(n_local, carry):
        base = pl.multiple_of(n_local * seg, 128)          # seg is a multiple of 128
        for t in range(kernel_size):                       # K is small: keep unrolled
            src = x_ref[n_local, :, pl.ds(t * dilation, l_out)]   # (C_in_pad, l_out) bf16
            xcol_ref[t * c_in_pad:(t + 1) * c_in_pad, pl.ds(base, l_out)] = src
        return carry

    lax.fori_loop(0, batches_per_tile, _build_one_batch, 0, unroll=True)

    # ---- conv as one MXU matmul (bf16 inputs, f32 accumulation), bias + ReLU ----
    acc = jnp.dot(w_ref[...], xcol_ref[...], preferred_element_type=jnp.float32)  # (Cb, tile_m)
    bias = p_ref[:, 0:1]
    y = jnp.maximum(acc + bias, 0.0)

    # ---- accumulate BN statistics (pad columns included; corrected in closed form later) ----
    sum_ref[...] += jnp.sum(y, axis=1, keepdims=True)
    ssq_ref[...] += jnp.sum(y * y, axis=1, keepdims=True)

    # ---- write this tile into the VMEM-resident output slab (128-aligned, unmasked) ----
    col0 = pl.multiple_of(m * tile_m, 128)
    o_ref[:, pl.ds(col0, tile_m)] = y

    # ---- finalize: normalize the whole resident slab in place at the last M tile ----
    @pl.when(m == n_m_tiles - 1)
    def _finalize():
        gamma = p_ref[:, 1:2]
        beta = p_ref[:, 2:3]
        rb = jnp.maximum(p_ref[:, 0:1], 0.0)          # every pad column equals relu(bias)
        n_pad = float(total_m - m_valid)
        inv_n = 1.0 / float(m_valid)
        s = sum_ref[...] - n_pad * rb
        mean = s * inv_n
        q = ssq_ref[...] - n_pad * (rb * rb)
        var = jnp.maximum(q * inv_n - mean * mean, 0.0)   # biased variance (BN training)
        scale = lax.rsqrt(var + EPS) * gamma
        # TODO(synk): optionally emit the slab in bf16 if downstream tolerates it
        # (halves HBM writeback; this kernel is writeback-bound for small K*C_in).
        o_ref[...] = ((o_ref[...] - mean) * scale + beta).astype(o_ref.dtype)


def _pick_batches_per_tile(n_batches, kc_pad, c_in_pad, l_pad, seg,
                           budget_bytes=16 * 1024 * 1024):
    """Largest divisor of N whose tile-dependent VMEM (im2col + double-buffered x block)
    fits the budget."""
    for d in range(n_batches, 0, -1):
        if n_batches % d != 0:
            continue
        tile_bytes = kc_pad * d * seg * 2 + 2 * d * c_in_pad * l_pad * 2
        if tile_bytes <= budget_bytes:
            return d
    return 1


def conv1d_relu_bn(x, w, b, gamma, beta, *, stride=1, padding=0, dilation=1,
                   c_blocks=1, batches_per_tile=None):
    """Fused Conv1d(+bias) -> ReLU -> BatchNorm1d (training batch stats).

    x: (N, C_in, L) f32, w: (C_out, C_in, K) f32, b/gamma/beta: (C_out,) f32.
    Returns (N, C_out, L_out) f32.

    c_blocks: number of C_out blocks (leading "parallel" grid axis).  Default 1 (no redundant
    im2col rebuilds, full MXU rows).  Set 2 on v7x so each TensorCore owns one block.
    """
    # TODO(synk): stride > 1 would need a strided im2col gather; ECAPA's Conv1dReluBn uses stride=1.
    assert stride == 1, "only stride=1 implemented"
    N, C_in, L = x.shape
    C_out, _, K = w.shape
    L_out = (L + 2 * padding - dilation * (K - 1) - 1) // stride + 1
    assert L_out > 0

    c_in_pad = _round_up(C_in, 16)          # bf16 sublane packing: 16-row tap blocks
    l_pad = L + 2 * padding
    seg = _round_up(L_out, 128)             # per-batch 128-aligned output segment
    M = N * seg
    m_valid = N * L_out
    kc_pad = K * c_in_pad

    assert C_out % c_blocks == 0
    c_block = C_out // c_blocks
    if c_blocks > 1:
        assert c_block % 16 == 0, "C_out blocks must be >=16-row aligned"

    if batches_per_tile is None:
        batches_per_tile = _pick_batches_per_tile(N, kc_pad, c_in_pad, l_pad, seg)
    assert N % batches_per_tile == 0
    n_m_tiles = N // batches_per_tile
    tile_m = batches_per_tile * seg
    # TODO(synk): if c_block*M*4 alone exceeds VMEM (very large N*L), a second-level split of M
    # with a two-pass BN through HBM would be needed; the resident-slab design covers ECAPA sizes.

    # ---- wrapper-side layout plumbing (cheap, one-time) ----
    # Halo pad along L + channel pad to a multiple of 16, cast to bf16 (halves input HBM traffic,
    # makes every in-kernel tap copy full-width and 128-aligned).
    x_pad = jnp.pad(x, ((0, 0), (0, c_in_pad - C_in), (padding, padding))).astype(jnp.bfloat16)
    # Contraction rows are tap-major: w2[o, t*C_in_pad + c] = w[o, c, t] (zero for padded c).
    w_pad = jnp.pad(w, ((0, 0), (0, c_in_pad - C_in), (0, 0)))
    w2 = jnp.transpose(w_pad, (0, 2, 1)).reshape(C_out, kc_pad).astype(jnp.bfloat16)
    params = jnp.stack([b, gamma, beta], axis=1).astype(jnp.float32)   # (C_out, 3)

    # ---- explicit VMEM budget (defaults are only 16/32 MiB scoped) ----
    bytes_x = 2 * batches_per_tile * c_in_pad * l_pad * 2      # double-buffered bf16 x tile
    bytes_w = 2 * c_block * kc_pad * 2                         # bf16 weight block
    bytes_p = 2 * c_block * 128 * 4                            # params (lane-padded)
    bytes_out = 2 * c_block * M * 4                            # resident f32 output slab
    bytes_col = kc_pad * tile_m * 2                            # bf16 im2col scratch
    bytes_stats = 4 * c_block * 128 * 4
    vmem_limit = int(1.25 * (bytes_x + bytes_w + bytes_p + bytes_out + bytes_col + bytes_stats))
    vmem_limit = min(max(vmem_limit + (2 << 20), 32 << 20), 127 * 1024 * 1024)

    kern = functools.partial(
        conv_relu_bn_kernel,
        kernel_size=K, dilation=dilation, c_in_pad=c_in_pad, seg=seg, l_out=L_out,
        batches_per_tile=batches_per_tile, m_valid=m_valid)

    slab = pl.pallas_call(
        kern,
        out_shape=jax.ShapeDtypeStruct((C_out, M), jnp.float32),
        grid=(c_blocks, n_m_tiles),
        in_specs=[
            pl.BlockSpec((batches_per_tile, c_in_pad, l_pad), lambda j, m: (m, 0, 0)),
            pl.BlockSpec((c_block, kc_pad), lambda j, m: (j, 0)),
            pl.BlockSpec((c_block, 3), lambda j, m: (j, 0)),
        ],
        # Output block index ignores the M axis -> slab stays VMEM-resident across M tiles.
        out_specs=pl.BlockSpec((c_block, M), lambda j, m: (j, 0)),
        scratch_shapes=[
            pltpu.VMEM((kc_pad, tile_m), jnp.bfloat16),   # im2col tile
            pltpu.VMEM((c_block, 1), jnp.float32),        # per-channel sum
            pltpu.VMEM((c_block, 1), jnp.float32),        # per-channel sum of squares
        ],
        compiler_params=pltpu.CompilerParams(
            dimension_semantics=("parallel", "arbitrary"),
            vmem_limit_bytes=vmem_limit),
    )(x_pad, w2, params)

    # Layout plumbing back to PyTorch's (N, C_out, L_out).
    y = slab.reshape(C_out, N, seg)[:, :, :L_out]
    return jnp.transpose(y, (1, 0, 2))


# ---------------------------------------------------------------------------
# Pure-JAX reference for verification.
# ---------------------------------------------------------------------------
def reference(x, w, b, gamma, beta, *, stride, padding, dilation):
    y = lax.conv_general_dilated(
        x, w, window_strides=(stride,), padding=[(padding, padding)],
        rhs_dilation=(dilation,), dimension_numbers=("NCH", "OIH", "NCH"))
    y = y + b[None, :, None]
    y = jnp.maximum(y, 0.0)
    mean = jnp.mean(y, axis=(0, 2), keepdims=True)
    var = jnp.mean((y - mean) ** 2, axis=(0, 2), keepdims=True)
    return (y - mean) * lax.rsqrt(var + EPS) * gamma[None, :, None] + beta[None, :, None]


if __name__ == "__main__":
    # Conv1dReluBn(in_channels=8, out_channels=16, kernel_size=3, stride=1, padding=1,
    # dilation=1, bias=True) at small shapes.
    N, C_in, C_out, L, K, PAD, STRIDE, DIL = 2, 8, 16, 16, 3, 1, 1, 1

    key = jax.random.PRNGKey(0)
    kx, kw, kb, kg, kbeta = jax.random.split(key, 5)
    x = jax.random.normal(kx, (N, C_in, L), jnp.float32)
    w = jax.random.normal(kw, (C_out, C_in, K), jnp.float32) / jnp.sqrt(C_in * K)
    b = 0.1 * jax.random.normal(kb, (C_out,), jnp.float32)
    gamma = jax.random.uniform(kg, (C_out,), jnp.float32, 0.5, 1.5)
    beta = 0.1 * jax.random.normal(kbeta, (C_out,), jnp.float32)

    # batches_per_tile=1 forces 2 M-tiles so the two-phase BN accumulation path is exercised.
    out = conv1d_relu_bn(x, w, b, gamma, beta, stride=STRIDE, padding=PAD, dilation=DIL,
                         batches_per_tile=1)
    out = jax.block_until_ready(out)

    # The kernel runs the conv on bf16-rounded inputs with f32 accumulation (MXU-native path);
    # compare against the f32 reference evaluated on the same bf16-rounded x/w.
    xq = x.astype(jnp.bfloat16).astype(jnp.float32)
    wq = w.astype(jnp.bfloat16).astype(jnp.float32)
    ref = reference(xq, wq, b, gamma, beta, stride=STRIDE, padding=PAD, dilation=DIL)

    assert out.shape == (N, C_out, L), out.shape
    err = float(jnp.max(jnp.abs(out - ref)))
    assert jnp.allclose(out, ref, rtol=1e-2, atol=1e-2), err

    print("KERNEL_OK")
</pallas_src>

<mosaic_0001>
module attributes {stable_mosaic.version = 11 : i64} {
  func.func @conv_relu_bn_kernel(%arg0: i32, %arg1: i32, %arg2: memref<1x16x18xbf16, #tpu.memory_space<vmem>>, %arg3: memref<16x48xbf16, #tpu.memory_space<vmem>>, %arg4: memref<16x3xf32, #tpu.memory_space<vmem>>, %arg5: memref<16x256xf32, #tpu.memory_space<vmem>>, %arg6: memref<48x128xbf16, #tpu.memory_space<vmem>>, %arg7: memref<16x1xf32, #tpu.memory_space<vmem>>, %arg8: memref<16x1xf32, #tpu.memory_space<vmem>>) attributes {dimension_semantics = [#tpu.dimension_semantics<parallel>, #tpu.dimension_semantics<arbitrary>], iteration_bounds = array<i64: 1, 2>, scalar_prefetch = 0 : i64, scratch_operands = 3 : i64, tpu.core_type = #tpu.core_type<tc>, window_params = [{transform_indices = @transform_0, window_bounds = array<i64: 1, 16, 18>}, {transform_indices = @transform_1, window_bounds = array<i64: 16, 48>}, {transform_indices = @transform_2, window_bounds = array<i64: 16, 3>}, {transform_indices = @transform_3, window_bounds = array<i64: 16, 256>}]} {
    %c0_i32 = arith.constant 0 : i32
    %0 = arith.cmpi eq, %arg1, %c0_i32 : i32
    %1 = arith.extui %0 : i1 to i32
    %c0_i32_0 = arith.constant 0 : i32
    %2 = arith.cmpi ne, %1, %c0_i32_0 : i32
    scf.if %2 {
      %cst_27 = arith.constant 0.000000e+00 : f32
      %46 = vector.broadcast %cst_27 : f32 to vector<16x1xf32>
      %c0_28 = arith.constant 0 : index
      %c0_29 = arith.constant 0 : index
      %47 = vector.load %arg7[%c0_28, %c0_29] : memref<16x1xf32, #tpu.memory_space<vmem>>, vector<16x1xf32>
      tpu.vector_store %arg7[%c0_28, %c0_29], %46 {strides = array<i32>} : memref<16x1xf32, #tpu.memory_space<vmem>>, vector<16x1xf32>,
      %cst_30 = arith.constant 0.000000e+00 : f32
      %48 = vector.broadcast %cst_30 : f32 to vector<16x1xf32>
      %c0_31 = arith.constant 0 : index
      %c0_32 = arith.constant 0 : index
      %49 = vector.load %arg8[%c0_31, %c0_32] : memref<16x1xf32, #tpu.memory_space<vmem>>, vector<16x1xf32>
      tpu.vector_store %arg8[%c0_31, %c0_32], %48 {strides = array<i32>} : memref<16x1xf32, #tpu.memory_space<vmem>>, vector<16x1xf32>,
      %cst_33 = arith.constant 0.000000e+00 : bf16
      %50 = vector.broadcast %cst_33 : bf16 to vector<48x112xbf16>
      %c0_34 = arith.constant 0 : index
      %c16_35 = arith.constant 16 : index
      %51 = vector.load %arg6[%c0_34, %c16_35] : memref<48x128xbf16, #tpu.memory_space<vmem>>, vector<48x112xbf16>
      tpu.vector_store %arg6[%c0_34, %c16_35], %50 {strides = array<i32>} : memref<48x128xbf16, #tpu.memory_space<vmem>>, vector<48x112xbf16>,
    } else {
    }
    %c0_i32_1 = arith.constant 0 : i32
    %c128_i32 = arith.constant 128 : i32
    %3 = arith.muli %c0_i32_1, %c128_i32 : i32
    %4 = tpu.assume_multiple %3, 128 : i32
    %5 = arith.index_cast %c0_i32_1 : i32 to index
    %c0 = arith.constant 0 : index
    %c0_2 = arith.constant 0 : index
    %6 = vector.load %arg2[%5, %c0, %c0_2] : memref<1x16x18xbf16, #tpu.memory_space<vmem>>, vector<1x16x16xbf16>
    %7 = vector.shape_cast %6 : vector<1x16x16xbf16> to vector<16x16xbf16>
    %c0_3 = arith.constant 0 : index
    %8 = arith.index_cast %4 : i32 to index
    %9 = vector.load %arg6[%c0_3, %8] : memref<48x128xbf16, #tpu.memory_space<vmem>>, vector<16x16xbf16>
    tpu.vector_store %arg6[%c0_3, %8], %7 {strides = array<i32>} : memref<48x128xbf16, #tpu.memory_space<vmem>>, vector<16x16xbf16>,
    %10 = arith.index_cast %c0_i32_1 : i32 to index
    %c0_4 = arith.constant 0 : index
    %c1 = arith.constant 1 : index
    %11 = vector.load %arg2[%10, %c0_4, %c1] : memref<1x16x18xbf16, #tpu.memory_space<vmem>>, vector<1x16x16xbf16>
    %12 = vector.shape_cast %11 : vector<1x16x16xbf16> to vector<16x16xbf16>
    %c16 = arith.constant 16 : index
    %13 = arith.index_cast %4 : i32 to index
    %14 = vector.load %arg6[%c16, %13] : memref<48x128xbf16, #tpu.memory_space<vmem>>, vector<16x16xbf16>
    tpu.vector_store %arg6[%c16, %13], %12 {strides = array<i32>} : memref<48x128xbf16, #tpu.memory_space<vmem>>, vector<16x16xbf16>,
    %15 = arith.index_cast %c0_i32_1 : i32 to index
    %c0_5 = arith.constant 0 : index
    %c2 = arith.constant 2 : index
    %16 = vector.load %arg2[%15, %c0_5, %c2] : memref<1x16x18xbf16, #tpu.memory_space<vmem>>, vector<1x16x16xbf16>
    %17 = vector.shape_cast %16 : vector<1x16x16xbf16> to vector<16x16xbf16>
    %c32 = arith.constant 32 : index
    %18 = arith.index_cast %4 : i32 to index
    %19 = vector.load %arg6[%c32, %18] : memref<48x128xbf16, #tpu.memory_space<vmem>>, vector<16x16xbf16>
    tpu.vector_store %arg6[%c32, %18], %17 {strides = array<i32>} : memref<48x128xbf16, #tpu.memory_space<vmem>>, vector<16x16xbf16>,
    %c1_i32 = arith.constant 1 : i32
    %c0_6 = arith.constant 0 : index
    %c0_7 = arith.constant 0 : index
    %20 = vector.load %arg3[%c0_6, %c0_7] : memref<16x48xbf16, #tpu.memory_space<vmem>>, vector<16x48xbf16>
    %c0_8 = arith.constant 0 : index
    %c0_9 = arith.constant 0 : index
    %21 = vector.load %arg6[%c0_8, %c0_9] : memref<48x128xbf16, #tpu.memory_space<vmem>>, vector<48x128xbf16>
    %cst = arith.constant dense<0.000000e+00> : vector<16x128xf32>
    %22 = tpu.matmul %20, %21, %cst {dimension_numbers = #tpu.dot_dimension_numbers<[1], [0], [0], [1], [0, 0, 1, 1], [], []>} : vector<16x48xbf16>, vector<48x128xbf16>, vector<16x128xf32> -> vector<16x128xf32>
    %c0_10 = arith.constant 0 : index
    %c0_11 = arith.constant 0 : index
    %23 = vector.load %arg4[%c0_10, %c0_11] : memref<16x3xf32, #tpu.memory_space<vmem>>, vector<16x1xf32>
    %24 = vector.broadcast %23 : vector<16x1xf32> to vector<16x128xf32>
    %25 = arith.addf %22, %24 : vector<16x128xf32>
    %cst_12 = arith.constant 0.000000e+00 : f32
    %26 = vector.broadcast %cst_12 : f32 to vector<16x128xf32>
    %27 = arith.maximumf %25, %26 : vector<16x128xf32>
    %c0_13 = arith.constant 0 : index
    %c0_14 = arith.constant 0 : index
    %28 = vector.load %arg7[%c0_13, %c0_14] : memref<16x1xf32, #tpu.memory_space<vmem>>, vector<16x1xf32>
    %cst_15 = arith.constant dense<0.000000e+00> : vector<16xf32>
    %29 = vector.multi_reduction <add>, %27, %cst_15 [1] : vector<16x128xf32> to vector<16xf32>
    %30 = vector.shape_cast %29 : vector<16xf32> to vector<16x1xf32>
    %31 = arith.addf %28, %30 : vector<16x1xf32>
    %c0_16 = arith.constant 0 : index
    %c0_17 = arith.constant 0 : index
    %32 = vector.load %arg7[%c0_16, %c0_17] : memref<16x1xf32, #tpu.memory_space<vmem>>, vector<16x1xf32>
    tpu.vector_store %arg7[%c0_16, %c0_17], %31 {strides = array<i32>} : memref<16x1xf32, #tpu.memory_space<vmem>>, vector<16x1xf32>,
    %c0_18 = arith.constant 0 : index
    %c0_19 = arith.constant 0 : index
    %33 = vector.load %arg8[%c0_18, %c0_19] : memref<16x1xf32, #tpu.memory_space<vmem>>, vector<16x1xf32>
    %34 = arith.mulf %27, %27 : vector<16x128xf32>
    %cst_20 = arith.constant dense<0.000000e+00> : vector<16xf32>
    %35 = vector.multi_reduction <add>, %34, %cst_20 [1] : vector<16x128xf32> to vector<16xf32>
    %36 = vector.shape_cast %35 : vector<16xf32> to vector<16x1xf32>
    %37 = arith.addf %33, %36 : vector<16x1xf32>
    %c0_21 = arith.constant 0 : index
    %c0_22 = arith.constant 0 : index
    %38 = vector.load %arg8[%c0_21, %c0_22] : memref<16x1xf32, #tpu.memory_space<vmem>>, vector<16x1xf32>
    tpu.vector_store %arg8[%c0_21, %c0_22], %37 {strides = array<i32>} : memref<16x1xf32, #tpu.memory_space<vmem>>, vector<16x1xf32>,
    %c128_i32_23 = arith.constant 128 : i32
    %39 = arith.muli %arg1, %c128_i32_23 : i32
    %40 = tpu.assume_multiple %39, 128 : i32
    %c0_24 = arith.constant 0 : index
    %41 = arith.index_cast %40 : i32 to index
    %42 = vector.load %arg5[%c0_24, %41] : memref<16x256xf32, #tpu.memory_space<vmem>>, vector<16x128xf32>
    tpu.vector_store %arg5[%c0_24, %41], %27 {strides = array<i32>} : memref<16x256xf32, #tpu.memory_space<vmem>>, vector<16x128xf32>,
    %c1_i32_25 = arith.constant 1 : i32
    %43 = arith.cmpi eq, %arg1, %c1_i32_25 : i32
    %44 = arith.extui %43 : i1 to i32
    %c0_i32_26 = arith.constant 0 : i32
    %45 = arith.cmpi ne, %44, %c0_i32_26 : i32
    scf.if %45 {
      %c0_27 = arith.constant 0 : index
      %c1_28 = arith.constant 1 : index
      %46 = vector.load %arg4[%c0_27, %c1_28] : memref<16x3xf32, #tpu.memory_space<vmem>>, vector<16x1xf32>
      %c0_29 = arith.constant 0 : index
      %c2_30 = arith.constant 2 : index
      %47 = vector.load %arg4[%c0_29, %c2_30] : memref<16x3xf32, #tpu.memory_space<vmem>>, vector<16x1xf32>
      %c0_31 = arith.constant 0 : index
      %c0_32 = arith.constant 0 : index
      %48 = vector.load %arg4[%c0_31, %c0_32] : memref<16x3xf32, #tpu.memory_space<vmem>>, vector<16x1xf32>
      %cst_33 = arith.constant 0.000000e+00 : f32
      %49 = vector.broadcast %cst_33 : f32 to vector<16x1xf32>
      %50 = arith.maximumf %48, %49 : vector<16x1xf32>
      %c0_34 = arith.constant 0 : index
      %c0_35 = arith.constant 0 : index
      %51 = vector.load %arg7[%c0_34, %c0_35] : memref<16x1xf32, #tpu.memory_space<vmem>>, vector<16x1xf32>
      %cst_36 = arith.constant 2.240000e+02 : f32
      %52 = vector.broadcast %cst_36 : f32 to vector<16x1xf32>
      %53 = arith.mulf %52, %50 : vector<16x1xf32>
      %54 = arith.subf %51, %53 : vector<16x1xf32>
      %cst_37 = arith.constant 3.125000e-02 : f32
      %55 = vector.broadcast %cst_37 : f32 to vector<16x1xf32>
      %56 = arith.mulf %54, %55 : vector<16x1xf32>
      %c0_38 = arith.constant 0 : index
      %c0_39 = arith.constant 0 : index
      %57 = vector.load %arg8[%c0_38, %c0_39] : memref<16x1xf32, #tpu.memory_space<vmem>>, vector<16x1xf32>
      %58 = arith.mulf %50, %50 : vector<16x1xf32>
      %cst_40 = arith.constant 2.240000e+02 : f32
      %59 = vector.broadcast %cst_40 : f32 to vector<16x1xf32>
      %60 = arith.mulf %59, %58 : vector<16x1xf32>
      %61 = arith.subf %57, %60 : vector<16x1xf32>
      %cst_41 = arith.constant 3.125000e-02 : f32
      %62 = vector.broadcast %cst_41 : f32 to vector<16x1xf32>
      %63 = arith.mulf %61, %62 : vector<16x1xf32>
      %64 = arith.mulf %56, %56 : vector<16x1xf32>
      %65 = arith.subf %63, %64 : vector<16x1xf32>
      %cst_42 = arith.constant 0.000000e+00 : f32
      %66 = vector.broadcast %cst_42 : f32 to vector<16x1xf32>
      %67 = arith.maximumf %65, %66 : vector<16x1xf32>
      %cst_43 = arith.constant 9.99999974E-6 : f32
      %68 = vector.broadcast %cst_43 : f32 to vector<16x1xf32>
      %69 = arith.addf %67, %68 : vector<16x1xf32>
      %70 = math.rsqrt %69 : vector<16x1xf32>
      %71 = arith.mulf %70, %46 : vector<16x1xf32>
      %c0_44 = arith.constant 0 : index
      %c0_45 = arith.constant 0 : index
      %72 = vector.load %arg5[%c0_44, %c0_45] : memref<16x256xf32, #tpu.memory_space<vmem>>, vector<16x256xf32>
      %73 = vector.broadcast %56 : vector<16x1xf32> to vector<16x256xf32>
      %74 = arith.subf %72, %73 : vector<16x256xf32>
      %75 = vector.broadcast %71 : vector<16x1xf32> to vector<16x256xf32>
      %76 = arith.mulf %74, %75 : vector<16x256xf32>
      %77 = vector.broadcast %47 : vector<16x1xf32> to vector<16x256xf32>
      %78 = arith.addf %76, %77 : vector<16x256xf32>
      %c0_46 = arith.constant 0 : index
      %c0_47 = arith.constant 0 : index
      %79 = vector.load %arg5[%c0_46, %c0_47] : memref<16x256xf32, #tpu.memory_space<vmem>>, vector<16x256xf32>
      tpu.vector_store %arg5[%c0_46, %c0_47], %78 {strides = array<i32>} : memref<16x256xf32, #tpu.memory_space<vmem>>, vector<16x256xf32>,
    } else {
    }
    return
  }
  func.func @transform_0(%arg0: i32, %arg1: i32) -> (i32, i32, i32) {
    %c0_i32 = arith.constant 0 : i32
    %c0_i32_0 = arith.constant 0 : i32
    %c0_i32_1 = arith.constant 0 : i32
    return %arg1, %c0_i32, %c0_i32_0 : i32, i32, i32
  }
  func.func @transform_1(%arg0: i32, %arg1: i32) -> (i32, i32) {
    %c0_i32 = arith.constant 0 : i32
    %c0_i32_0 = arith.constant 0 : i32
    return %arg0, %c0_i32 : i32, i32
  }
  func.func @transform_2(%arg0: i32, %arg1: i32) -> (i32, i32) {
    %c0_i32 = arith.constant 0 : i32
    %c0_i32_0 = arith.constant 0 : i32
    return %arg0, %c0_i32 : i32, i32
  }
  func.func @transform_3(%arg0: i32, %arg1: i32) -> (i32, i32) {
    %c0_i32 = arith.constant 0 : i32
    %c0_i32_0 = arith.constant 0 : i32
    return %arg0, %c0_i32 : i32, i32
  }
}

</mosaic_0001>

<llo_original>
// kernel: tpu_custom_call.1
$region0: #{tpu_custom_call.1}
  #allocation0 [shape = 'u32[]', space=smem, size = 0x4, offset = 0x4, fixed_abs, tag = 'smem constant byte address 0x4 - core index']
  #allocation1 [shape = 'u32[144,128]{1,0:T(1,128)}', space=vmem, size = 0x12000, scoped, tag = 'internal scratch']
  #allocation2 [shape = 'bf16[48,128]{1,0:T(8,128)(2,1)}', space=vmem, size = 0x3000, scoped, tag = 'scratch operand']
  #allocation3 [shape = 'f32[16,1]{1,0:T(8,128)}', space=vmem, size = 0x2000, scoped, tag = 'scratch operand']
  #allocation4 [shape = 'f32[16,1]{1,0:T(8,128)}', space=vmem, size = 0x2000, scoped, tag = 'scratch operand']
  %s0 = inlined_call_operand.vmem [shape: bf16[2,16,18], index: 0, kind: input, shape index: {}]
  %s1 = inlined_call_operand.hbm [shape: bf16[16,48], index: 1, kind: input, shape index: {}]
  %s2 = inlined_call_operand.vmem [shape: f32[16,3], index: 2, kind: input, shape index: {}]
  %s3 = inlined_call_operand.hbm [shape: f32[16,256], index: 3, kind: output, shape index: {}]
  %s4 = sld [smem:[#allocation0]]
  $region57: #{tpu_custom_call.1} parent=0
    _
  %s6 = ssub.s32 1, %s4
  %s7 = scalar_select 0, %s6, %s4
  $region1: #{tpu_custom_call.1} parent=0
    #allocation5 [shape = 'u8[4096]{0}', space=vmem, size = 0x1000, scoped, tag = 'input window, operand 1, single buffered']
    #allocation6 [shape = 's32[2]{0}', space=sflag, size = 0x8, scoped, tag = 'scoped memory for tpu_custom_call.1']
    #allocation7 [shape = 's32[2]{0}', space=sflag, size = 0x8, scoped, tag = 'scoped memory for tpu_custom_call.1']
    #allocation8 [shape = 'u8[16384]{0}', space=vmem, size = 0x4000, scoped, tag = 'output window, operand 0, single buffered']
    %8 = vsyncpa [#allocation6], 0
    %9 = vsyncpa [#allocation7], 0
    loop: start=0, step=1, limit=4
    $region2: #{tpu_custom_call.1} parent=1 // loop_pre_header
      _
    $region3: #{tpu_custom_call.1} parent=1 // loop_header
      %s11 = sphi 0, %s15
      %p12 = scmp.ge.s32.totalorder %s11, 4
      %s18 = sphi 0, %s30
      %s19 = sphi 0, %s26
      %s20 = sphi 0, %s18
      %s21 = sphi 0, %s19
      %s22 = sphi 0, %s20
      %s23 = sphi 0, %s21
      %s33 = sphi 0, %s35
      %s36 = sphi 0, %s33
      %s37 = sphi 0, %s36
      %s53 = sphi 0, %s37
      %s59 = sphi 0, %s61
      %s62 = sphi 0, %s59
      %s63 = sphi 0, %s62
      %s79 = sphi 0, %s63
      %s85 = sphi 0, %s87
      %s88 = sphi 0, %s85
      %s89 = sphi 0, %s88
      %s105 = sphi 0, %s89
      %s111 = sphi 0, %s113
      %s114 = sphi 0, %s111
      %s115 = sphi 0, %s114
      %s131 = sphi 0, %s115
    $region4: #{tpu_custom_call.1} parent=1 // loop_header_branch
      %14 = sbr.rel (%p12) target = $region8
    $region5: #{tpu_custom_call.1} parent=1 // loop_body
      %s16 = ssub.s32 %s11, 1
      %s17 = ssub.s32 %s11, 2
      %s24 = sadd.s32 1, %s19
      %p25 = scmp.ge.s32.totalorder %s24, 2
      %s26 = scalar_select %p25, 0, %s24
      %s27 = sadd.s32 1, %s18
      %s28 = scalar_select %p25, %s27, %s18
      %p29 = scmp.ge.s32.totalorder %s28, 1
      %s30 = scalar_select %p29, 0, %s28
      %s31 = ssub.s32 %s19, %s26
      %p32 = scmp.eq.s32.totalorder %s31, 0
      %s34 = sadd.s32 %s33, 1
      %s35 = scalar_select %p32, %s33, %s34
      %p38 = pneg %p32
      %p39 = scmp.eq.s32.totalorder %s11, 1
      %p40 = por %p38, %p39
      %p41 = scmp.ne.s32.totalorder %s33, %s36
      %p42 = scmp.eq.s32.totalorder %s11, 0
      %p43 = por %p41, %p42
      %p44 = scmp.ne.s32.totalorder %s33, %s36
      %p45 = scmp.eq.s32.totalorder %s16, 1
      %p46 = por %p44, %p45
      %p47 = scmp.ne.s32.totalorder %s36, %s37
      %p48 = scmp.eq.s32.totalorder %s16, 0
      %p49 = por %p47, %p48
      %p50 = scmp.ne.s32.totalorder %s36, %s37
      %p51 = scmp.eq.s32.totalorder %s17, 1
      %p52 = por %p50, %p51
      %p54 = scmp.ne.s32.totalorder %s37, %s53
      %p55 = scmp.eq.s32.totalorder %s17, 0
      %p56 = por %p54, %p55
      %s57 = ssub.s32 %s18, %s30
      %p58 = scmp.eq.s32.totalorder %s57, 0
      %s60 = sadd.s32 %s59, 1
      %s61 = scalar_select %p58, %s59, %s60
      %p64 = pneg %p58
      %p65 = scmp.eq.s32.totalorder %s11, 1
      %p66 = por %p64, %p65
      %p67 = scmp.ne.s32.totalorder %s59, %s62
      %p68 = scmp.eq.s32.totalorder %s11, 0
      %p69 = por %p67, %p68
      %p70 = scmp.ne.s32.totalorder %s59, %s62
      %p71 = scmp.eq.s32.totalorder %s16, 1
      %p72 = por %p70, %p71
      %p73 = scmp.ne.s32.totalorder %s62, %s63
      %p74 = scmp.eq.s32.totalorder %s16, 0
      %p75 = por %p73, %p74
      %p76 = scmp.ne.s32.totalorder %s62, %s63
      %p77 = scmp.eq.s32.totalorder %s17, 1
      %p78 = por %p76, %p77
      %p80 = scmp.ne.s32.totalorder %s63, %s79
      %p81 = scmp.eq.s32.totalorder %s17, 0
      %p82 = por %p80, %p81
      %s83 = ssub.s32 %s18, %s30
      %p84 = scmp.eq.s32.totalorder %s83, 0
      %s86 = sadd.s32 %s85, 1
      %s87 = scalar_select %p84, %s85, %s86
      %p90 = pneg %p84
      %p91 = scmp.eq.s32.totalorder %s11, 1
      %p92 = por %p90, %p91
      %p93 = scmp.ne.s32.totalorder %s85, %s88
      %p94 = scmp.eq.s32.totalorder %s11, 0
      %p95 = por %p93, %p94
      %p96 = scmp.ne.s32.totalorder %s85, %s88
      %p97 = scmp.eq.s32.totalorder %s16, 1
      %p98 = por %p96, %p97
      %p99 = scmp.ne.s32.totalorder %s88, %s89
      %p100 = scmp.eq.s32.totalorder %s16, 0
      %p101 = por %p99, %p100
      %p102 = scmp.ne.s32.totalorder %s88, %s89
      %p103 = scmp.eq.s32.totalorder %s17, 1
      %p104 = por %p102, %p103
      %p106 = scmp.ne.s32.totalorder %s89, %s105
      %p107 = scmp.eq.s32.totalorder %s17, 0
      %p108 = por %p106, %p107
      %s109 = ssub.s32 %s18, %s30
      %p110 = scmp.eq.s32.totalorder %s109, 0
      %s112 = sadd.s32 %s111, 1
      %s113 = scalar_select %p110, %s111, %s112
      %p116 = pneg %p110
      %p117 = scmp.eq.s32.totalorder %s11, 1
      %p118 = por %p116, %p117
      %p119 = scmp.ne.s32.totalorder %s111, %s114
      %p120 = scmp.eq.s32.totalorder %s11, 0
      %p121 = por %p119, %p120
      %p122 = scmp.ne.s32.totalorder %s111, %s114
      %p123 = scmp.eq.s32.totalorder %s16, 1
      %p124 = por %p122, %p123
      %p125 = scmp.ne.s32.totalorder %s114, %s115
      %p126 = scmp.eq.s32.totalorder %s16, 0
      %p127 = por %p125, %p126
      %p128 = scmp.ne.s32.totalorder %s114, %s115
      %p129 = scmp.eq.s32.totalorder %s17, 1
      %p130 = por %p128, %p129
      %p132 = scmp.ne.s32.totalorder %s115, %s131
      %p133 = scmp.eq.s32.totalorder %s17, 0
      %p134 = por %p132, %p133
      %p135 = scmp.le.s32.totalorder 1, %s11
      %p136 = scmp.lt.s32.totalorder %s11, 3
      %p137 = pnand %p135, %p136
      %p138 = pneg %p137
      // Predicated region
      $region9: #{tpu_custom_call.1} parent=5 // pred_check
        _
      $region10: #{tpu_custom_call.1} parent=5 // pred_check_branch
        %140 = sbr.rel (%p137) target = $region12
      $region11: #{tpu_custom_call.1} parent=5 // pred_region
        %s141 = ssub.s32 %s11, 1
        // Predicated region
        $region13: #{tpu_custom_call.1} parent=11 // pred_check
          %p142 = pneg %p75
        $region14: #{tpu_custom_call.1} parent=11 // pred_check_branch
          %144 = sbr.rel (%p142) target = $region16
        $region15: #{tpu_custom_call.1} parent=11 // pred_region
          %s145 = smul.u32 2, %s20
          %s147 = ssub.s32 128, 128
          %148 = vsyncadd [#allocation6], %s147
          %s149 = smul.addr %s145, 64
          %s150 = scalar_lea.hbm %s1, %s149
          %s151 = sshll.u32 [#allocation5], 4
          %s152 = int_to_ptr.vmem [resolvable:$true] %s151
          %157 = dma.hbm_to_vmem [thread:$0]  %s150, 128, %s152, [#allocation6], 64, 64, 4
        $region16: #{tpu_custom_call.1} parent=11 // pred_fallthru
          _
        // Predicated region
        $region17: #{tpu_custom_call.1} parent=11 // pred_check
          %p158 = pneg %p101
        $region18: #{tpu_custom_call.1} parent=11 // pred_check_branch
          %160 = sbr.rel (%p158) target = $region20
        $region19: #{tpu_custom_call.1} parent=11 // pred_region
          %s161 = smul.u32 2, %s20
          %p162 = scmp.lt.s32.totalorder %s161, 1
          %s163 = scalar_select %p162, %s161, 1
          %s164 = smul.addr %s163, 8
          %s165 = scalar_lea.vmem %s2, %s164
          %s166 = smul.u32 2, %s20
        $region20: #{tpu_custom_call.1} parent=11 // pred_fallthru
          _
      $region12: #{tpu_custom_call.1} parent=5 // pred_fallthru
        _
      %p167 = scmp.lt.s32.totalorder %s11, 2
      // Predicated region
      $region21: #{tpu_custom_call.1} parent=5 // pred_check
        %p168 = pneg %p167
      $region22: #{tpu_custom_call.1} parent=5 // pred_check_branch
        %170 = sbr.rel (%p168) target = $region24
      $region23: #{tpu_custom_call.1} parent=5 // pred_region
        // Predicated region
        $region25: #{tpu_custom_call.1} parent=23 // pred_check
          %p171 = pneg %p43
        $region26: #{tpu_custom_call.1} parent=23 // pred_check_branch
          %173 = sbr.rel (%p171) target = $region28
        $region27: #{tpu_custom_call.1} parent=23 // pred_region
          %p174 = scmp.lt.s32.totalorder %s19, 1
          %s175 = scalar_select %p174, %s19, 1
          %s176 = smul.addr %s175, 2
          %s177 = smul.addr %s176, 4
          %s178 = scalar_lea.vmem %s0, %s177
        $region28: #{tpu_custom_call.1} parent=23 // pred_fallthru
          _
      $region24: #{tpu_custom_call.1} parent=5 // pred_fallthru
        _
      %p179 = scmp.le.s32.totalorder 1, %s11
      %p180 = scmp.lt.s32.totalorder %s11, 3
      %p181 = pnand %p179, %p180
      %p182 = pneg %p181
      // Predicated region
      $region29: #{tpu_custom_call.1} parent=5 // pred_check
        _
      $region30: #{tpu_custom_call.1} parent=5 // pred_check_branch
        %184 = sbr.rel (%p181) target = $region32
      $region31: #{tpu_custom_call.1} parent=5 // pred_region
        %s185 = ssub.s32 %s11, 1
        // Predicated region
        $region33: #{tpu_custom_call.1} parent=31 // pred_check
          %p186 = pneg %p75
        $region34: #{tpu_custom_call.1} parent=31 // pred_check_branch
          %188 = sbr.rel (%p186) target = $region36
        $region35: #{tpu_custom_call.1} parent=31 // pred_region
          %189 = dma.done [#allocation6], 128
        $region36: #{tpu_custom_call.1} parent=31 // pred_fallthru
          _
        %p190 = scmp.lt.s32.totalorder %s21, 1
        %s191 = scalar_select %p190, %s21, 1
        %s192 = smul.addr %s191, 2
        %s193 = smul.addr %s192, 4
        %s194 = scalar_lea.vmem %s0, %s193
        %p195 = pneg %p49
        %p196 = pneg %p46
        %p197 = pneg %p75
        %p198 = pneg %p72
        %s199 = smul.u32 2, %s20
        %p200 = scmp.lt.s32.totalorder %s199, 1
        %s201 = scalar_select %p200, %s199, 1
        %s202 = smul.addr %s201, 8
        %s203 = scalar_lea.vmem %s2, %s202
        %p204 = pneg %p101
        %p205 = pneg %p98
        %p206 = pneg %p127
        %p207 = pneg %p124
        %p208 = scmp.lt.s32.totalorder %s21, 1
        %s209 = scalar_select %p208, %s21, 1
        %s210 = smul.addr %s209, 2
        %s211 = smul.addr %s210, 4
        %s212 = scalar_lea.vmem %s0, %s211
        %s213 = smul.u32 2, %s20
        %s214 = smul.u32 2, %s20
        %p215 = scmp.lt.s32.totalorder %s214, 1
        %s216 = scalar_select %p215, %s214, 1
        %s217 = smul.addr %s216, 8
        %s218 = scalar_lea.vmem %s2, %s217
        %s219 = smul.u32 2, %s20
        %s220 = smul.u32 2, %s20
        %p222 = scmp.eq.s32.totalorder %s21, 0
        // Predicated region
        $region37: #{tpu_custom_call.1} parent=31 // pred_check
          %p223 = pneg %p222
        $region38: #{tpu_custom_call.1} parent=31 // pred_check_branch
          %225 = sbr.rel (%p223) target = $region40
        $region39: #{tpu_custom_call.1} parent=31 // pred_region
          %vm226 = vcmask 7168
          %227 = vst.msk [vmem:[#allocation3] sm:$0xff] %vm226, 0.0
          %228 = vst.msk [vmem:[#allocation3 + $0x8] sm:$0xff] %vm226, 0.0
          %229 = vst.msk [vmem:[#allocation4] sm:$0xff] %vm226, 0.0
          %230 = vst.msk [vmem:[#allocation4 + $0x8] sm:$0xff] %vm226, 0.0
          %vm231 = vcmask 1043584
          %232 = vst.msk [vmem:[#allocation2] sm:$0xf] %vm231, 0
          %233 = vst.msk [vmem:[#allocation2 + $0x4] sm:$0xf] %vm231, 0
          %234 = vst.msk [vmem:[#allocation2 + $0x8] sm:$0xf] %vm231, 0
          %235 = vst.msk [vmem:[#allocation2 + $0xc] sm:$0xf] %vm231, 0
          %236 = vst.msk [vmem:[#allocation2 + $0x10] sm:$0xf] %vm231, 0
          %237 = vst.msk [vmem:[#allocation2 + $0x14] sm:$0xf] %vm231, 0
        $region40: #{tpu_custom_call.1} parent=31 // pred_fallthru
          _
        %v238 = vld [vmem:[%s212] sm:$0xf]
        %v239 = vld [vmem:[%s212 + $0x4] sm:$0xf]
        %vm240 = vcmask 125952
        %241 = vst.msk [vmem:[#allocation2] sm:$0xf] %vm240, %v238
        %242 = vst.msk [vmem:[#allocation2 + $0x4] sm:$0xf] %vm240, %v239
        %v243 = vld [vmem:[%s212] sm:$0xf]
        %v244 = vld [vmem:[%s212 + $0x4] sm:$0xf]
        %247 = vrot.lane.b32.xlu0 %v243, 127
        %v248 = vpop.permute.xlu0 %247
        %249 = vrot.lane.b32.xlu0 %v244, 127
        %v250 = vpop.permute.xlu0 %249
        %253 = vst.msk [vmem:[#allocation2 + $0x8] sm:$0xf] %vm240, %v248
        %254 = vst.msk [vmem:[#allocation2 + $0xc] sm:$0xf] %vm240, %v250
        %v255 = vld [vmem:[%s212] sm:$0xf]
        %v256 = vld [vmem:[%s212 + $0x4] sm:$0xf]
        %259 = vrot.lane.b32.xlu0 %v255, 126
        %v260 = vpop.permute.xlu0 %259
        %261 = vrot.lane.b32.xlu0 %v256, 126
        %v262 = vpop.permute.xlu0 %261
        %265 = vst.msk [vmem:[#allocation2 + $0x10] sm:$0xf] %vm240, %v260
        %266 = vst.msk [vmem:[#allocation2 + $0x14] sm:$0xf] %vm240, %v262
        %v267 = vld [vmem:[#allocation5] sm:$0xf]
        %v268 = vld [vmem:[#allocation5 + $0x4] sm:$0xf]
        %v269 = vld [vmem:[#allocation2] sm:$0xf]
        %v270 = vld [vmem:[#allocation2 + $0x4] sm:$0xf]
        %v271 = vld [vmem:[#allocation2 + $0x8] sm:$0xf]
        %v272 = vld [vmem:[#allocation2 + $0xc] sm:$0xf]
        %v273 = vld [vmem:[#allocation2 + $0x10] sm:$0xf]
        %v274 = vld [vmem:[#allocation2 + $0x14] sm:$0xf]
        %v275 = vld [vmem:[%s218] sm:$0xff]
        %v276 = vld [vmem:[%s218 + $0x8] sm:$0xff]
        %278 = vset.pattern.permute.xlu0 0
        %279 = vperm.xlu0 %278, %v275
        %v280 = vpop.permute.xlu0 %279
        %283 = vset.pattern.permute.xlu0 0
        %284 = vperm.xlu0 %283, %v276
        %v285 = vpop.permute.xlu0 %284
        %v289 = vunpack.c.l.b16 %v267
        %v290 = vunpack.c.l.b16 %v268
        %v291 = vpack.c.b16 %v290, %v289
        %v298 = vunpack.c.l.b16 %v269
        %v299 = vunpack.c.l.b16 %v270
        %v300 = vunpack.c.l.b16 %v271
        %v301 = vunpack.c.l.b16 %v272
        %v302 = vunpack.c.l.b16 %v273
        %v303 = vunpack.c.l.b16 %v274
        %v304 = vpack.c.b16 %v299, %v298
        %v305 = vpack.c.b16 %v301, %v300
        %v306 = vpack.c.b16 %v303, %v302
        %vm310 = vcmask 392192
        %v312 = vsel %vm310, %v291, 0
        %314 = vmatprep.subr.bf16.mxu0 0
        %315 = vmatpush1.bf16.msra.mxu0 0
        %316 = vmatprep.subr.bf16.mxu0 0
        %317 = vmatpush1.bf16.msra.mxu0 0
        %318 = vmatprep.subr.bf16.mxu0 0
        %319 = vmatpush1.bf16.msra.mxu0 0
        %320 = vmatprep.subr.bf16.mxu0 0
        %321 = vmatpush1.bf16.msra.mxu0 0
        %322 = vmatprep.subr.bf16.mxu0 0
        %323 = vmatpush1.bf16.msra.mxu0 0
        %324 = vmatprep.subr.bf16.mxu0 0
        %325 = vmatpush1.bf16.msra.mxu0 %v306
        %326 = vmatprep.subr.bf16.mxu0 0
        %327 = vmatpush1.bf16.msra.mxu0 %v305
        %328 = vmatprep.subr.bf16.mxu0 0
        %329 = vmatpush1.bf16.msra.mxu0 %v304
        %330 = vmatprep.subr.bf16.mxu0 0
        %331 = vmatpush2.bf16.msra.mxu0 0
        %332 = vmatprep.subr.bf16.mxu0 0
        %333 = vmatpush2.bf16.msra.mxu0 0
        %334 = vmatprep.subr.bf16.mxu0 0
        %335 = vmatpush2.bf16.msra.mxu0 0
        %336 = vmatprep.subr.bf16.mxu0 0
        %337 = vmatpush2.bf16.msra.mxu0 0
        %338 = vmatprep.subr.bf16.mxu0 0
        %339 = vmatpush2.bf16.msra.mxu0 0
        %340 = vmatprep.subr.bf16.mxu0 0
        %341 = vmatpush2.bf16.msra.mxu0 0
        %342 = vmatprep.subr.bf16.mxu0 0
        %343 = vmatpush2.bf16.msra.mxu0 0
        %344 = vmatprep.subr.bf16.mxu0 0
        %345 = vmatpush2.bf16.msra.mxu0 0
        %346 = vmatprep.mubr.bf16.mxu0 0
        %347 = vmatmul.mubr.bf16.gmra.mxu0 %v312
        %v348 = vpop.f32.mrf.mxu0
        %v349 = vadd.f32 %v280, %v348
        %v350 = vpop.f32.mrf.mxu0
        %v351 = vpop.f32.mrf.mxu0
        %v352 = vadd.f32 %v285, %v351
        %v353 = vpop.f32.mrf.mxu0
        %354 = vdwg.mxu0
        %v355 = vmax.f32 %v349, 0.0
        %v356 = vmax.f32 %v352, 0.0
        %v357 = vld [vmem:[#allocation3] sm:$0xff]
        %v358 = vld [vmem:[#allocation3 + $0x8] sm:$0xff]
        %359 = vadd.xlane.f32.xlu0 %v355
        %v360 = vpop.xlane.xlu0 %359
        %361 = vadd.xlane.f32.xlu0 %v356
        %v362 = vpop.xlane.xlu0 %361
        %v363 = vadd.f32 %v357, %v360
        %v364 = vadd.f32 %v358, %v362
        %vm365 = vcmask 7168
        %366 = vst.msk [vmem:[#allocation3] sm:$0xff] %vm365, %v363
        %367 = vst.msk [vmem:[#allocation3 + $0x8] sm:$0xff] %vm365, %v364
        %v368 = vld [vmem:[#allocation4] sm:$0xff]
        %v369 = vld [vmem:[#allocation4 + $0x8] sm:$0xff]
        %v370 = vmul.f32 %v355, %v355
        %v371 = vmul.f32 %v356, %v356
        %372 = vadd.xlane.f32.xlu0 %v370
        %v373 = vpop.xlane.xlu0 %372
        %374 = vadd.xlane.f32.xlu0 %v371
        %v375 = vpop.xlane.xlu0 %374
        %v376 = vadd.f32 %v368, %v373
        %v377 = vadd.f32 %v369, %v375
        %378 = vst.msk [vmem:[#allocation4] sm:$0xff] %vm365, %v376
        %379 = vst.msk [vmem:[#allocation4 + $0x8] sm:$0xff] %vm365, %v377
        %s380 = smul.u32 %s21, 128
        %s381 = sshra.s32 %s380, 7
        %s382 = sand.u32 %s380, 127
        %s383 = smul.addr %s381, 8
        %s384 = scalar_lea.vmem [#allocation8], %s383
        %385 = vst [vmem:[%s384] sm:$0xff] %v355
        %386 = vst [vmem:[%s384 + $0x10] sm:$0xff] %v356
        %p387 = scmp.eq.s32.totalorder %s21, 1
        // Predicated region
        $region41: #{tpu_custom_call.1} parent=31 // pred_check
          %p388 = pneg %p387
        $region42: #{tpu_custom_call.1} parent=31 // pred_check_branch
          %390 = sbr.rel (%p388) target = $region44
        $region43: #{tpu_custom_call.1} parent=31 // pred_region
          %v391 = vld [vmem:[%s218] sm:$0xff]
          %v392 = vld [vmem:[%s218 + $0x8] sm:$0xff]
          %v393 = vmax.f32 %v391, 0.0
          %v394 = vmax.f32 %v392, 0.0
          %v395 = vld [vmem:[#allocation3] sm:$0xff]
          %v396 = vld [vmem:[#allocation3 + $0x8] sm:$0xff]
          %v397 = vmul.f32 %v393, 224.0
          %v398 = vmul.f32 %v394, 224.0
          %v399 = vsub.f32 %v395, %v397
          %v400 = vsub.f32 %v396, %v398
          %v401 = vmul.f32 %v399, 0.03125
          %v402 = vmul.f32 %v400, 0.03125
          %v403 = vld [vmem:[#allocation4] sm:$0xff]
          %v404 = vld [vmem:[#allocation4 + $0x8] sm:$0xff]
          %v405 = vmul.f32 %v393, %v393
          %v406 = vmul.f32 %v394, %v394
          %v407 = vmul.f32 %v405, 224.0
          %v408 = vmul.f32 %v406, 224.0
          %v409 = vsub.f32 %v403, %v407
          %v410 = vsub.f32 %v404, %v408
          %v411 = vmul.f32 %v409, 0.03125
          %v412 = vmul.f32 %v410, 0.03125
          %v413 = vmul.f32 %v401, %v401
          %v414 = vmul.f32 %v402, %v402
          %v415 = vsub.f32 %v411, %v413
          %v416 = vsub.f32 %v412, %v414
          %v417 = vmax.f32 %v415, 0.0
          %v418 = vmax.f32 %v416, 0.0
          %v419 = vadd.f32 %v417, 1e-05
          %v420 = vadd.f32 %v418, 1e-05
          %v421 = vrsqrt.pop %v419
          %v422 = vrsqrt.pop %v420
          %425 = vrot.lane.b32.xlu0 %v391, 127
          %v426 = vpop.permute.xlu0 %425
          %427 = vrot.lane.b32.xlu0 %v392, 127
          %v428 = vpop.permute.xlu0 %427
          %v431 = vmul.f32 %v421, %v426
          %v432 = vmul.f32 %v422, %v428
          %v433 = vld [vmem:[#allocation8] sm:$0xff]
          %v434 = vld [vmem:[#allocation8 + $0x8] sm:$0xff]
          %v435 = vld [vmem:[#allocation8 + $0x10] sm:$0xff]
          %v436 = vld [vmem:[#allocation8 + $0x18] sm:$0xff]
          %438 = vset.pattern.permute.xlu0 0
          %439 = vperm.xlu0 %438, %v401
          %v440 = vpop.permute.xlu0 %439
          %443 = vset.pattern.permute.xlu0 0
          %444 = vperm.xlu0 %443, %v402
          %v445 = vpop.permute.xlu0 %444
          %v447 = vsub.f32 %v433, %v440
          %v448 = vsub.f32 %v434, %v440
          %v449 = vsub.f32 %v435, %v445
          %v450 = vsub.f32 %v436, %v445
          %452 = vset.pattern.permute.xlu0 0
          %453 = vperm.xlu0 %452, %v431
          %v454 = vpop.permute.xlu0 %453
          %457 = vset.pattern.permute.xlu0 0
          %458 = vperm.xlu0 %457, %v432
          %v459 = vpop.permute.xlu0 %458
          %v461 = vmul.f32 %v447, %v454
          %v462 = vmul.f32 %v448, %v454
          %v463 = vmul.f32 %v449, %v459
          %v464 = vmul.f32 %v450, %v459
          %465 = vset.pattern.permute.xlu0 2
          %466 = vperm.xlu0 %465, %v391
          %v467 = vpop.permute.xlu0 %466
          %469 = vset.pattern.permute.xlu0 2
          %470 = vperm.xlu0 %469, %v392
          %v471 = vpop.permute.xlu0 %470
          %v473 = vadd.f32 %v461, %v467
          %v474 = vadd.f32 %v462, %v467
          %v475 = vadd.f32 %v463, %v471
          %v476 = vadd.f32 %v464, %v471
          %477 = vst [vmem:[#allocation8] sm:$0xff] %v473
          %478 = vst [vmem:[#allocation8 + $0x8] sm:$0xff] %v474
          %479 = vst [vmem:[#allocation8 + $0x10] sm:$0xff] %v475
          %480 = vst [vmem:[#allocation8 + $0x18] sm:$0xff] %v476
        $region44: #{tpu_custom_call.1} parent=31 // pred_fallthru
          _
        // Predicated region
        $region45: #{tpu_custom_call.1} parent=31 // pred_check
          %p481 = pneg %p124
        $region46: #{tpu_custom_call.1} parent=31 // pred_check_branch
          %483 = sbr.rel (%p481) target = $region48
        $region47: #{tpu_custom_call.1} parent=31 // pred_region
          %s484 = smul.u32 2, %s20
          %s486 = ssub.s32 512, 512
          %487 = vsyncadd [#allocation7], %s486
          %s488 = smul.addr %s484, 2
          %s489 = smul.addr %s488, 128
          %s490 = scalar_lea.hbm %s3, %s489
          %s491 = sshll.u32 [#allocation8], 4
          %s492 = int_to_ptr.vmem [resolvable:$true] %s491
          %497 = dma.vmem_to_hbm [thread:$0]  %s492, 512, %s490, [#allocation7], 256, 256, 16
        $region48: #{tpu_custom_call.1} parent=31 // pred_fallthru
          _
        // Predicated region
        $region49: #{tpu_custom_call.1} parent=31 // pred_check
          %p498 = pneg %p124
        $region50: #{tpu_custom_call.1} parent=31 // pred_check_branch
          %500 = sbr.rel (%p498) target = $region52
        $region51: #{tpu_custom_call.1} parent=31 // pred_region
          %501 = dma.done [#allocation7], 512
        $region52: #{tpu_custom_call.1} parent=31 // pred_fallthru
          _
      $region32: #{tpu_custom_call.1} parent=5 // pred_fallthru
        _
      %p502 = scmp.le.s32.totalorder 2, %s11
      // Predicated region
      $region53: #{tpu_custom_call.1} parent=5 // pred_check
        %p503 = pneg %p502
      $region54: #{tpu_custom_call.1} parent=5 // pred_check_branch
        %505 = sbr.rel (%p503) target = $region56
      $region55: #{tpu_custom_call.1} parent=5 // pred_region
        %s506 = ssub.s32 %s11, 2
      $region56: #{tpu_custom_call.1} parent=5 // pred_fallthru
        _
    $region6: #{tpu_custom_call.1} parent=1 // loop_footer
      %s15 = sadd.s32 1, %s11
    $region7: #{tpu_custom_call.1} parent=1 // loop_footer_branch
      %10 = sbr.rel target = $region3
    $region8: #{tpu_custom_call.1} parent=1 // loop_exit
      _
    %507 = vsyncpa [#allocation6], 1
    %s508 = scalar_lea.sflag [#allocation6], 1
    %509 = vsyncpa %s508, 1
    %510 = vsyncpa [#allocation7], 1
    %s511 = scalar_lea.sflag [#allocation7], 1
    %512 = vsyncpa %s511, 1

</llo_original>
